<compile_context>
chip_gen: v7x
topology: tpu7x:2x2x1
jax: 0.10.0
libtpu: 0.0.40
codegen_flags: <defaults>
</compile_context>

<pallas_src>
import functools

import jax
import jax.numpy as jnp
from jax.experimental import pallas as pl
from jax.experimental.pallas import tpu as pltpu


def _round_up(x, m):
    return (x + m - 1) // m * m


# ----------------------------------------------------------------------------
# One-off probe: how does pltpu.roll behave on this backend?
#   'roll_np'  : pltpu.roll matches np.roll (expected / fast XLU path)
#   'roll_rev' : opposite shift convention
#   'concat'   : roll unavailable -> concatenate-based cyclic shift fallback
# ----------------------------------------------------------------------------
_ROLL_MODE = []


def _roll_probe_kernel(x_ref, o_ref):
    o_ref[...] = pltpu.roll(x_ref[...], 1, axis=1)


def _lane_shift_mode():
    if _ROLL_MODE:
        return _ROLL_MODE[0]
    mode = 'concat'
    try:
        x = jnp.arange(8 * 128, dtype=jnp.float32).reshape(8, 128)
        out = pl.pallas_call(
            _roll_probe_kernel,
            out_shape=jax.ShapeDtypeStruct((8, 128), jnp.float32))(x)
        first = float(jax.block_until_ready(out)[0, 0])
        if first == 127.0:
            mode = 'roll_np'
        elif first == 1.0:
            mode = 'roll_rev'
    except Exception:
        mode = 'concat'
    _ROLL_MODE.append(mode)
    return mode


# ----------------------------------------------------------------------------
# Kernel
# ----------------------------------------------------------------------------
def _grad3d_kernel(x_ref, o_ref, acc_ref, carry_ref, *,
                   penalty, wy, wx, wz, D, W, HW, HWp, tR, T, NCD, roll_mode):
    p = pl.program_id(0)          # partition (parallel axis)
    t = pl.program_id(1)          # row tile within the partition (reduction axis)

    @pl.when(t == 0)
    def _init():
        acc_ref[...] = jnp.zeros_like(acc_ref)

    # Global index (into the fused N*C*D plane axis) of the tile's first row.
    row0 = (p * T + t) * tR

    # Block is DMA'd in the input dtype; upcast in-register.
    xb = x_ref[...].astype(jnp.float32)                        # (tR, HWp)

    lane = jax.lax.broadcasted_iota(jnp.int32, (1, HWp), 1)    # lane index
    row = row0 + jax.lax.broadcasted_iota(jnp.int32, (tR, 1), 0)
    row_ok = row < NCD                                         # ragged-tile mask

    def shifted(k):
        # shifted(k)[r, j] == xb[r, (j + k) % HWp]; wrapped lanes get masked.
        if roll_mode == 'roll_np':
            return pltpu.roll(xb, (HWp - k) % HWp, axis=1)
        if roll_mode == 'roll_rev':
            return pltpu.roll(xb, k % HWp, axis=1)
        return jnp.concatenate([xb[:, k:], xb[:, :k]], axis=1)

    # dx: finite difference along H == stride-W shift in the fused lane axis.
    dx = jnp.abs(shifted(W) - xb)
    # dz: finite difference along W == stride-1 shift in the fused lane axis.
    dz = jnp.abs(shifted(1) - xb)
    if penalty == 'l2':
        dx = dx * dx
        dz = dz * dz
    m_x = row_ok & (lane < HW - W)                             # h < H-1 (drops lane padding too)
    m_z = row_ok & (lane < HW) & ((lane % W) < (W - 1))        # w < W-1, real lanes only
    contrib = jnp.where(m_x, dx, 0.0) * wx + jnp.where(m_z, dz, 0.0) * wz

    # dy: finite difference along D == previous fused row.  Row 0 of the tile
    # diffs against the carried last plane of the previous tile; rows at
    # channel starts (global row % D == 0) and out-of-range rows are masked.
    dy_b = jnp.abs(xb[0:1, :] - carry_ref[...])
    if penalty == 'l2':
        dy_b = dy_b * dy_b
    m_yb = row_ok[0:1, :] & ((row[0:1, :] % D) != 0)
    dy_sum = jnp.where(m_yb, dy_b, 0.0)
    if tR > 1:
        dy_i = jnp.abs(xb[1:, :] - xb[:-1, :])
        if penalty == 'l2':
            dy_i = dy_i * dy_i
        m_yi = row_ok[1:, :] & ((row[1:, :] % D) != 0)
        dy_sum = dy_sum + jnp.sum(jnp.where(m_yi, dy_i, 0.0), axis=0,
                                  keepdims=True)

    # Sublane-only reduction per step; cross-lane reduction is deferred.
    acc_ref[...] += jnp.sum(contrib, axis=0, keepdims=True) + dy_sum * wy

    # Carry this tile's last plane for the next tile's boundary diff.
    carry_ref[...] = xb[tR - 1:tR, :]

    @pl.when(t == T - 1)
    def _finalize():
        o_ref[0] = acc_ref[...]


# ----------------------------------------------------------------------------
# Tiling / wrapper
# ----------------------------------------------------------------------------
def _choose_tiling(NC, D, HWp, itemsize, target_block_bytes, row_block):
    """Pick (partitions P, rows per tile tR, tiles per partition T).

    Partitions are channel-aligned (no dy state crosses a partition, so the
    leading grid axis can be 'parallel' for megacore / v7x's 2 TCs).  Row tiles
    are multiples of 8 sublanes sized to ~target_block_bytes of VMEM.
    """
    NCD = NC * D
    if NCD < 8:                                  # degenerate: one full block
        return 1, NCD, 1

    row_bytes = HWp * itemsize
    if row_block is not None:
        max_rows = max(8, (int(row_block) // 8) * 8)
    else:
        max_rows = max(8, (target_block_bytes // row_bytes) // 8 * 8)

    # Two channel-aligned partitions when the split is clean.
    if NC % 2 == 0 and ((NC // 2) * D) % 8 == 0 and NCD >= 16:
        rpp = NCD // 2                           # rows per partition
        tR = (min(max_rows, rpp) // 8) * 8
        while tR > 8 and rpp % tR != 0:          # tR must evenly tile the partition
            tR -= 8
        return 2, tR, rpp // tR

    tR = max(8, min(max_rows, (NCD // 8) * 8))
    T = -(-NCD // tR)                            # cdiv; ragged last tile is masked
    return 1, tR, T


def grad3d_loss(y_pred, y_true=None, *, penalty='l1', loss_mult=None,
                row_block=None, target_block_bytes=4 * 1024 * 1024):
    """Pallas TPU implementation of Grad3d.forward (y_true unused, as in torch)."""
    assert penalty in ('l1', 'l2')
    N, C, D, H, W = y_pred.shape
    assert D >= 2 and H >= 2 and W >= 2, "spatial dims must be >= 2"
    NC = N * C
    NCD = NC * D
    HW = H * W
    HWp = _round_up(HW, 128)

    x = y_pred.reshape(NCD, HW)
    if HWp != HW:
        # Lane-pad so the fused H*W axis is a multiple of 128 (lane-dense vregs,
        # aligned XLU rolls).  Padding lanes are zero and masked in-kernel.
        x = jnp.pad(x, ((0, 0), (0, HWp - HW)))

    mult = 1.0 if loss_mult is None else float(loss_mult)
    wy = mult / (3.0 * NC * (D - 1) * H * W)     # per-element weight for dy terms
    wx = mult / (3.0 * NC * D * (H - 1) * W)     # ... dx terms
    wz = mult / (3.0 * NC * D * H * (W - 1))     # ... dz terms

    P, tR, T = _choose_tiling(NC, D, HWp, x.dtype.itemsize,
                              target_block_bytes, row_block)

    kernel = functools.partial(
        _grad3d_kernel, penalty=penalty, wy=wy, wx=wx, wz=wz,
        D=D, W=W, HW=HW, HWp=HWp, tR=tR, T=T, NCD=NCD,
        roll_mode=_lane_shift_mode())

    elems = NCD * HW
    cost = pl.CostEstimate(flops=12 * elems, transcendentals=0,
                           bytes_accessed=NCD * HWp * x.dtype.itemsize
                           + P * HWp * 4)

    partials = pl.pallas_call(
        kernel,
        out_shape=jax.ShapeDtypeStruct((P, 1, HWp), jnp.float32),
        grid_spec=pltpu.PrefetchScalarGridSpec(
            num_scalar_prefetch=0,
            grid=(P, T),
            in_specs=[pl.BlockSpec((tR, HWp), lambda p, t: (p * T + t, 0))],
            out_specs=pl.BlockSpec((1, 1, HWp), lambda p, t: (p, 0, 0)),
            scratch_shapes=[pltpu.VMEM((1, HWp), jnp.float32),    # lane accumulator
                            pltpu.VMEM((1, HWp), jnp.float32)]),  # carried last D-plane
        compiler_params=pltpu.CompilerParams(
            dimension_semantics=("parallel", "arbitrary"),
            vmem_limit_bytes=48 * 1024 * 1024),
        cost_estimate=cost,
    )(x)

    # Per-element weights (1/n, 1/3, loss_mult) were applied in-kernel, so the
    # loss is just the sum of the tiny per-partition lane partials.
    return jnp.sum(partials)


# ----------------------------------------------------------------------------
# Pure-JAX reference (mirrors the PyTorch module exactly)
# ----------------------------------------------------------------------------
def _grad3d_ref(y_pred, penalty='l1', loss_mult=None):
    p = y_pred.astype(jnp.float32)
    dy = jnp.abs(p[:, :, 1:, :, :] - p[:, :, :-1, :, :])
    dx = jnp.abs(p[:, :, :, 1:, :] - p[:, :, :, :-1, :])
    dz = jnp.abs(p[:, :, :, :, 1:] - p[:, :, :, :, :-1])
    if penalty == 'l2':
        dy, dx, dz = dy * dy, dx * dx, dz * dz
    d = jnp.mean(dx) + jnp.mean(dy) + jnp.mean(dz)
    grad = d / 3.0
    if loss_mult is not None:
        grad = grad * loss_mult
    return grad


if __name__ == "__main__":
    key = jax.random.PRNGKey(0)
    k1, k2, k3 = jax.random.split(key, 3)

    checks = []

    # Config 1: lane-aligned fused H*W (=256), 2 channel partitions, one tile each.
    y1 = jax.random.normal(k1, (2, 3, 8, 16, 16), dtype=jnp.float32)
    t1 = jax.random.normal(k2, (2, 3, 8, 16, 16), dtype=jnp.float32)
    for pen, lm in (('l1', None), ('l2', 2.0)):
        got = jax.block_until_ready(grad3d_loss(y1, t1, penalty=pen, loss_mult=lm))
        checks.append((f"cfg1-{pen}", got, _grad3d_ref(y1, pen, lm)))

    # Config 2: bf16 input, H*W=192 (lane-padded to 256), forced 8-row tiles:
    # exercises the carried D-plane across row tiles and both partitions.
    y2 = jax.random.normal(k3, (1, 2, 16, 12, 16),
                           dtype=jnp.float32).astype(jnp.bfloat16)
    got = jax.block_until_ready(grad3d_loss(y2, penalty='l1', row_block=8))
    checks.append(("cfg2-l1-bf16", got, _grad3d_ref(y2, 'l1', None)))

    # Config 3: odd channel count -> single partition, ragged (masked) last tile.
    y3 = jax.random.normal(k1, (1, 1, 20, 16, 16), dtype=jnp.float32)
    got = jax.block_until_ready(grad3d_loss(y3, penalty='l2', row_block=16,
                                            loss_mult=0.5))
    checks.append(("cfg3-l2-ragged", got, _grad3d_ref(y3, 'l2', 0.5)))

    ok = True
    for name, got, want in checks:
        if not jnp.allclose(got, want, rtol=1e-5, atol=1e-5):
            ok = False
            print(f"MISMATCH {name}: got={float(got):.8f} want={float(want):.8f}")
    if ok:
        print("KERNEL_OK")
</pallas_src>

<mosaic_0001>
module attributes {stable_mosaic.version = 11 : i64} {
  func.func @_roll_probe_kernel(%arg0: memref<8x128xf32, #tpu.memory_space<vmem>>, %arg1: memref<8x128xf32, #tpu.memory_space<vmem>>) attributes {dimension_semantics = [], scalar_prefetch = 0 : i64, scratch_operands = 0 : i64, tpu.core_type = #tpu.core_type<tc>} {
    %c0 = arith.constant 0 : index
    %c0_0 = arith.constant 0 : index
    %0 = vector.load %arg0[%c0, %c0_0] : memref<8x128xf32, #tpu.memory_space<vmem>>, vector<8x128xf32>
    %c1_i32 = arith.constant 1 : i32
    %1 = tpu.dynamic_rotate %0 by %c1_i32 dim 1 : vector<8x128xf32>, i32 -> vector<8x128xf32>
    %c0_1 = arith.constant 0 : index
    %c0_2 = arith.constant 0 : index
    %2 = vector.load %arg1[%c0_1, %c0_2] : memref<8x128xf32, #tpu.memory_space<vmem>>, vector<8x128xf32>
    tpu.vector_store %arg1[%c0_1, %c0_2], %1 {strides = array<i32>} : memref<8x128xf32, #tpu.memory_space<vmem>>, vector<8x128xf32>,
    return
  }
}

module attributes {stable_mosaic.version = 11 : i64} {
  func.func @_grad3d_kernel(%arg0: i32, %arg1: i32, %arg2: memref<24x256xf32, #tpu.memory_space<vmem>>, %arg3: memref<1x1x256xf32, #tpu.memory_space<vmem>>, %arg4: memref<1x256xf32, #tpu.memory_space<vmem>>, %arg5: memref<1x256xf32, #tpu.memory_space<vmem>>) attributes {dimension_semantics = [#tpu.dimension_semantics<parallel>, #tpu.dimension_semantics<arbitrary>], iteration_bounds = array<i64: 2, 1>, scalar_prefetch = 0 : i64, scratch_operands = 2 : i64, tpu.core_type = #tpu.core_type<tc>, window_params = [{transform_indices = @transform_0, window_bounds = array<i64: 24, 256>}, {transform_indices = @transform_1, window_bounds = array<i64: 1, 1, 256>}]} {
    %c0_i32 = arith.constant 0 : i32
    %0 = arith.cmpi eq, %arg1, %c0_i32 : i32
    %1 = arith.extui %0 : i1 to i32
    %c0_i32_0 = arith.constant 0 : i32
    %2 = arith.cmpi ne, %1, %c0_i32_0 : i32
    scf.if %2 {
      %cst_38 = arith.constant 0.000000e+00 : f32
      %136 = vector.broadcast %cst_38 : f32 to vector<1x256xf32>
      %c0_39 = arith.constant 0 : index
      %c0_40 = arith.constant 0 : index
      %137 = vector.load %arg4[%c0_39, %c0_40] : memref<1x256xf32, #tpu.memory_space<vmem>>, vector<1x256xf32>
      tpu.vector_store %arg4[%c0_39, %c0_40], %136 {strides = array<i32>} : memref<1x256xf32, #tpu.memory_space<vmem>>, vector<1x256xf32>,
    } else {
    }
    %c1_i32 = arith.constant 1 : i32
    %3 = arith.muli %arg0, %c1_i32 : i32
    %4 = arith.addi %3, %arg1 : i32
    %c24_i32 = arith.constant 24 : i32
    %5 = arith.muli %4, %c24_i32 : i32
    %c0 = arith.constant 0 : index
    %c0_1 = arith.constant 0 : index
    %6 = vector.load %arg2[%c0, %c0_1] : memref<24x256xf32, #tpu.memory_space<vmem>>, vector<24x256xf32>
    %7 = tpu.iota {dimensions = array<i32: 1>} : vector<1x256xi32>
    %8 = tpu.iota {dimensions = array<i32: 0>} : vector<24x1xi32>
    %9 = vector.broadcast %5 : i32 to vector<24x1xi32>
    %10 = arith.addi %9, %8 : vector<24x1xi32>
    %c48_i32 = arith.constant 48 : i32
    %11 = vector.broadcast %c48_i32 : i32 to vector<24x1xi32>
    %12 = arith.cmpi slt, %10, %11 : vector<24x1xi32>
    %13 = vector.extract_strided_slice %6 {offsets = [0, 16], sizes = [24, 240], strides = [1, 1]} : vector<24x256xf32> to vector<24x240xf32>
    %14 = vector.extract_strided_slice %6 {offsets = [0, 0], sizes = [24, 16], strides = [1, 1]} : vector<24x256xf32> to vector<24x16xf32>
    %15 = tpu.concatenate %13, %14 in 1 : vector<24x240xf32>, vector<24x16xf32> -> vector<24x256xf32>
    %16 = arith.subf %15, %6 : vector<24x256xf32>
    %17 = math.absf %16 : vector<24x256xf32>
    %18 = vector.extract_strided_slice %6 {offsets = [0, 1], sizes = [24, 255], strides = [1, 1]} : vector<24x256xf32> to vector<24x255xf32>
    %19 = vector.extract_strided_slice %6 {offsets = [0, 0], sizes = [24, 1], strides = [1, 1]} : vector<24x256xf32> to vector<24x1xf32>
    %20 = tpu.concatenate %18, %19 in 1 : vector<24x255xf32>, vector<24x1xf32> -> vector<24x256xf32>
    %21 = arith.subf %20, %6 : vector<24x256xf32>
    %22 = math.absf %21 : vector<24x256xf32>
    %c240_i32 = arith.constant 240 : i32
    %23 = vector.broadcast %c240_i32 : i32 to vector<1x256xi32>
    %24 = arith.cmpi slt, %7, %23 : vector<1x256xi32>
    %25 = vector.broadcast %12 : vector<24x1xi1> to vector<24x256xi1>
    %26 = vector.broadcast %24 : vector<1x256xi1> to vector<24x256xi1>
    %27 = arith.andi %25, %26 : vector<24x256xi1>
    %c256_i32 = arith.constant 256 : i32
    %28 = vector.broadcast %c256_i32 : i32 to vector<1x256xi32>
    %29 = arith.cmpi slt, %7, %28 : vector<1x256xi32>
    %30 = vector.broadcast %12 : vector<24x1xi1> to vector<24x256xi1>
    %31 = vector.broadcast %29 : vector<1x256xi1> to vector<24x256xi1>
    %32 = arith.andi %30, %31 : vector<24x256xi1>
    %c16_i32 = arith.constant 16 : i32
    %c0_i32_2 = arith.constant 0 : i32
    %33 = arith.cmpi eq, %c16_i32, %c0_i32_2 : i32
    %c1_i32_3 = arith.constant 1 : i32
    %34 = arith.select %33, %c1_i32_3, %c16_i32 : i32
    %35 = vector.broadcast %34 : i32 to vector<1x256xi32>
    %36 = arith.remsi %7, %35 : vector<1x256xi32>
    %c0_i32_4 = arith.constant 0 : i32
    %37 = vector.broadcast %c0_i32_4 : i32 to vector<1x256xi32>
    %38 = arith.cmpi ne, %36, %37 : vector<1x256xi32>
    %c0_i32_5 = arith.constant 0 : i32
    %39 = vector.broadcast %c0_i32_5 : i32 to vector<1x256xi32>
    %40 = arith.cmpi slt, %36, %39 : vector<1x256xi32>
    %c0_i32_6 = arith.constant 0 : i32
    %41 = arith.cmpi slt, %34, %c0_i32_6 : i32
    %42 = vector.broadcast %41 : i1 to vector<1x256xi1>
    %43 = vector.broadcast %42 : vector<1x256xi1> to vector<1x256xi1>
    %44 = arith.xori %40, %43 : vector<1x256xi1>
    %45 = arith.andi %44, %38 : vector<1x256xi1>
    %46 = vector.broadcast %34 : i32 to vector<1x256xi32>
    %47 = arith.addi %36, %46 : vector<1x256xi32>
    %48 = arith.select %45, %47, %36 : vector<1x256xi1>, vector<1x256xi32>
    %c15_i32 = arith.constant 15 : i32
    %49 = vector.broadcast %c15_i32 : i32 to vector<1x256xi32>
    %50 = arith.cmpi slt, %48, %49 : vector<1x256xi32>
    %51 = vector.broadcast %50 : vector<1x256xi1> to vector<24x256xi1>
    %52 = arith.andi %32, %51 : vector<24x256xi1>
    %cst = arith.constant 0.000000e+00 : f32
    %53 = vector.broadcast %cst : f32 to vector<24x256xf32>
    %54 = arith.select %27, %17, %53 : vector<24x256xi1>, vector<24x256xf32>
    %cst_7 = arith.constant 2.89351847E-5 : f32
    %55 = vector.broadcast %cst_7 : f32 to vector<24x256xf32>
    %56 = arith.mulf %54, %55 : vector<24x256xf32>
    %cst_8 = arith.constant 0.000000e+00 : f32
    %57 = vector.broadcast %cst_8 : f32 to vector<24x256xf32>
    %58 = arith.select %52, %22, %57 : vector<24x256xi1>, vector<24x256xf32>
    %cst_9 = arith.constant 2.89351847E-5 : f32
    %59 = vector.broadcast %cst_9 : f32 to vector<24x256xf32>
    %60 = arith.mulf %58, %59 : vector<24x256xf32>
    %61 = arith.addf %56, %60 : vector<24x256xf32>
    %62 = vector.extract_strided_slice %6 {offsets = [0, 0], sizes = [1, 256], strides = [1, 1]} : vector<24x256xf32> to vector<1x256xf32>
    %c0_10 = arith.constant 0 : index
    %c0_11 = arith.constant 0 : index
    %63 = vector.load %arg5[%c0_10, %c0_11] : memref<1x256xf32, #tpu.memory_space<vmem>>, vector<1x256xf32>
    %64 = arith.subf %62, %63 : vector<1x256xf32>
    %65 = math.absf %64 : vector<1x256xf32>
    %66 = vector.extract_strided_slice %12 {offsets = [0, 0], sizes = [1, 1], strides = [1, 1]} : vector<24x1xi1> to vector<1x1xi1>
    %67 = vector.extract_strided_slice %10 {offsets = [0, 0], sizes = [1, 1], strides = [1, 1]} : vector<24x1xi32> to vector<1x1xi32>
    %c8_i32 = arith.constant 8 : i32
    %c0_i32_12 = arith.constant 0 : i32
    %68 = arith.cmpi eq, %c8_i32, %c0_i32_12 : i32
    %c1_i32_13 = arith.constant 1 : i32
    %69 = arith.select %68, %c1_i32_13, %c8_i32 : i32
    %70 = vector.broadcast %69 : i32 to vector<1x1xi32>
    %71 = arith.remsi %67, %70 : vector<1x1xi32>
    %c0_i32_14 = arith.constant 0 : i32
    %72 = vector.broadcast %c0_i32_14 : i32 to vector<1x1xi32>
    %73 = arith.cmpi ne, %71, %72 : vector<1x1xi32>
    %c0_i32_15 = arith.constant 0 : i32
    %74 = vector.broadcast %c0_i32_15 : i32 to vector<1x1xi32>
    %75 = arith.cmpi slt, %71, %74 : vector<1x1xi32>
    %c0_i32_16 = arith.constant 0 : i32
    %76 = arith.cmpi slt, %69, %c0_i32_16 : i32
    %77 = vector.broadcast %76 : i1 to vector<1x1xi1>
    %78 = vector.broadcast %77 : vector<1x1xi1> to vector<1x1xi1>
    %79 = arith.xori %75, %78 : vector<1x1xi1>
    %80 = arith.andi %79, %73 : vector<1x1xi1>
    %81 = vector.broadcast %69 : i32 to vector<1x1xi32>
    %82 = arith.addi %71, %81 : vector<1x1xi32>
    %83 = arith.select %80, %82, %71 : vector<1x1xi1>, vector<1x1xi32>
    %c0_i32_17 = arith.constant 0 : i32
    %84 = vector.broadcast %c0_i32_17 : i32 to vector<1x1xi32>
    %85 = arith.cmpi ne, %83, %84 : vector<1x1xi32>
    %86 = arith.andi %66, %85 : vector<1x1xi1>
    %cst_18 = arith.constant 0.000000e+00 : f32
    %87 = vector.shape_cast %86 : vector<1x1xi1> to vector<1x1xi1>
    %88 = vector.broadcast %87 : vector<1x1xi1> to vector<1x256xi1>
    %89 = vector.broadcast %cst_18 : f32 to vector<1x256xf32>
    %90 = arith.select %88, %65, %89 : vector<1x256xi1>, vector<1x256xf32>
    %91 = vector.extract_strided_slice %6 {offsets = [1, 0], sizes = [23, 256], strides = [1, 1]} : vector<24x256xf32> to vector<23x256xf32>
    %92 = vector.extract_strided_slice %6 {offsets = [0, 0], sizes = [23, 256], strides = [1, 1]} : vector<24x256xf32> to vector<23x256xf32>
    %93 = arith.subf %91, %92 : vector<23x256xf32>
    %94 = math.absf %93 : vector<23x256xf32>
    %95 = vector.extract_strided_slice %12 {offsets = [1, 0], sizes = [23, 1], strides = [1, 1]} : vector<24x1xi1> to vector<23x1xi1>
    %96 = vector.extract_strided_slice %10 {offsets = [1, 0], sizes = [23, 1], strides = [1, 1]} : vector<24x1xi32> to vector<23x1xi32>
    %c8_i32_19 = arith.constant 8 : i32
    %c0_i32_20 = arith.constant 0 : i32
    %97 = arith.cmpi eq, %c8_i32_19, %c0_i32_20 : i32
    %c1_i32_21 = arith.constant 1 : i32
    %98 = arith.select %97, %c1_i32_21, %c8_i32_19 : i32
    %99 = vector.broadcast %98 : i32 to vector<23x1xi32>
    %100 = arith.remsi %96, %99 : vector<23x1xi32>
    %c0_i32_22 = arith.constant 0 : i32
    %101 = vector.broadcast %c0_i32_22 : i32 to vector<23x1xi32>
    %102 = arith.cmpi ne, %100, %101 : vector<23x1xi32>
    %c0_i32_23 = arith.constant 0 : i32
    %103 = vector.broadcast %c0_i32_23 : i32 to vector<23x1xi32>
    %104 = arith.cmpi slt, %100, %103 : vector<23x1xi32>
    %c0_i32_24 = arith.constant 0 : i32
    %105 = arith.cmpi slt, %98, %c0_i32_24 : i32
    %106 = vector.broadcast %105 : i1 to vector<23x1xi1>
    %107 = vector.broadcast %106 : vector<23x1xi1> to vector<23x1xi1>
    %108 = arith.xori %104, %107 : vector<23x1xi1>
    %109 = arith.andi %108, %102 : vector<23x1xi1>
    %110 = vector.broadcast %98 : i32 to vector<23x1xi32>
    %111 = arith.addi %100, %110 : vector<23x1xi32>
    %112 = arith.select %109, %111, %100 : vector<23x1xi1>, vector<23x1xi32>
    %c0_i32_25 = arith.constant 0 : i32
    %113 = vector.broadcast %c0_i32_25 : i32 to vector<23x1xi32>
    %114 = arith.cmpi ne, %112, %113 : vector<23x1xi32>
    %115 = arith.andi %95, %114 : vector<23x1xi1>
    %cst_26 = arith.constant 0.000000e+00 : f32
    %116 = vector.shape_cast %115 : vector<23x1xi1> to vector<23x1xi1>
    %117 = vector.broadcast %116 : vector<23x1xi1> to vector<23x256xi1>
    %118 = vector.broadcast %cst_26 : f32 to vector<23x256xf32>
    %119 = arith.select %117, %94, %118 : vector<23x256xi1>, vector<23x256xf32>
    %cst_27 = arith.constant dense<0.000000e+00> : vector<256xf32>
    %120 = vector.multi_reduction <add>, %119, %cst_27 [0] : vector<23x256xf32> to vector<256xf32>
    %121 = vector.shape_cast %120 : vector<256xf32> to vector<1x256xf32>
    %122 = arith.addf %90, %121 : vector<1x256xf32>
    %c0_28 = arith.constant 0 : index
    %c0_29 = arith.constant 0 : index
    %123 = vector.load %arg4[%c0_28, %c0_29] : memref<1x256xf32, #tpu.memory_space<vmem>>, vector<1x256xf32>
    %cst_30 = arith.constant dense<0.000000e+00> : vector<256xf32>
    %124 = vector.multi_reduction <add>, %61, %cst_30 [0] : vector<24x256xf32> to vector<256xf32>
    %125 = vector.shape_cast %124 : vector<256xf32> to vector<1x256xf32>
    %cst_31 = arith.constant 3.10019859E-5 : f32
    %126 = vector.broadcast %cst_31 : f32 to vector<1x256xf32>
    %127 = arith.mulf %122, %126 : vector<1x256xf32>
    %128 = arith.addf %125, %127 : vector<1x256xf32>
    %129 = arith.addf %123, %128 : vector<1x256xf32>
    %c0_32 = arith.constant 0 : index
    %c0_33 = arith.constant 0 : index
    %130 = vector.load %arg4[%c0_32, %c0_33] : memref<1x256xf32, #tpu.memory_space<vmem>>, vector<1x256xf32>
    tpu.vector_store %arg4[%c0_32, %c0_33], %129 {strides = array<i32>} : memref<1x256xf32, #tpu.memory_space<vmem>>, vector<1x256xf32>,
    %131 = vector.extract_strided_slice %6 {offsets = [23, 0], sizes = [1, 256], strides = [1, 1]} : vector<24x256xf32> to vector<1x256xf32>
    %c0_34 = arith.constant 0 : index
    %c0_35 = arith.constant 0 : index
    %132 = vector.load %arg5[%c0_34, %c0_35] : memref<1x256xf32, #tpu.memory_space<vmem>>, vector<1x256xf32>
    tpu.vector_store %arg5[%c0_34, %c0_35], %131 {strides = array<i32>} : memref<1x256xf32, #tpu.memory_space<vmem>>, vector<1x256xf32>,
    %c0_i32_36 = arith.constant 0 : i32
    %133 = arith.cmpi eq, %arg1, %c0_i32_36 : i32
    %134 = arith.extui %133 : i1 to i32
    %c0_i32_37 = arith.constant 0 : i32
    %135 = arith.cmpi ne, %134, %c0_i32_37 : i32
    scf.if %135 {
      %c0_38 = arith.constant 0 : index
      %c0_39 = arith.constant 0 : index
      %136 = vector.load %arg4[%c0_38, %c0_39] : memref<1x256xf32, #tpu.memory_space<vmem>>, vector<1x256xf32>
      %c0_40 = arith.constant 0 : index
      %c0_41 = arith.constant 0 : index
      %c0_42 = arith.constant 0 : index
      %137 = vector.load %arg3[%c0_40, %c0_41, %c0_42] : memref<1x1x256xf32, #tpu.memory_space<vmem>>, vector<1x1x256xf32>
      %138 = vector.shape_cast %137 : vector<1x1x256xf32> to vector<1x256xf32>
      %139 = vector.shape_cast %136 : vector<1x256xf32> to vector<1x1x256xf32>
      tpu.vector_store %arg3[%c0_40, %c0_41, %c0_42], %139 {strides = array<i32>} : memref<1x1x256xf32, #tpu.memory_space<vmem>>, vector<1x1x256xf32>,
    } else {
    }
    return
  }
  func.func @transform_0(%arg0: i32, %arg1: i32) -> (i32, i32) {
    %c1_i32 = arith.constant 1 : i32
    %0 = arith.muli %arg0, %c1_i32 : i32
    %1 = arith.addi %0, %arg1 : i32
    %c0_i32 = arith.constant 0 : i32
    %c0_i32_0 = arith.constant 0 : i32
    return %1, %c0_i32 : i32, i32
  }
  func.func @transform_1(%arg0: i32, %arg1: i32) -> (i32, i32, i32) {
    %c0_i32 = arith.constant 0 : i32
    %c0_i32_0 = arith.constant 0 : i32
    %c0_i32_1 = arith.constant 0 : i32
    return %arg0, %c0_i32, %c0_i32_0 : i32, i32, i32
  }
}

</mosaic_0001>

<llo_original>
// kernel: tpu_custom_call.1
$region0: #{tpu_custom_call.1}
  #allocation0 [shape = 'u32[]', space=smem, size = 0x4, offset = 0x4, fixed_abs, tag = 'smem constant byte address 0x4 - core index']
  #allocation1 [shape = 'u32[144,128]{1,0:T(1,128)}', space=vmem, size = 0x12000, scoped, tag = 'internal scratch']
  %s0 = inlined_call_operand.hbm [shape: f32[8,128], index: 0, kind: input, shape index: {}]
  %s1 = inlined_call_operand.hbm [shape: f32[8,128], index: 1, kind: output, shape index: {}]
  %s2 = sld [smem:[#allocation0]]
  $region18: #{tpu_custom_call.1} parent=0
    _
  %s4 = ssub.s32 1, %s2
  %s5 = scalar_select 0, %s4, %s2
  $region1: #{tpu_custom_call.1} parent=0
    #allocation2 [shape = 'u8[4096]{0}', space=vmem, size = 0x1000, scoped, tag = 'input window, operand 0, single buffered']
    #allocation3 [shape = 's32[1]{0}', space=sflag, size = 0x4, scoped, tag = 'scoped memory for tpu_custom_call.1']
    #allocation4 [shape = 's32[1]{0}', space=sflag, size = 0x4, scoped, tag = 'scoped memory for tpu_custom_call.1']
    #allocation5 [shape = 'u8[4096]{0}', space=vmem, size = 0x1000, scoped, tag = 'output window, operand 0, single buffered']
    %6 = vsyncpa [#allocation3], 0
    %7 = vsyncpa [#allocation4], 0
    // Predicated region
    $region2: #{tpu_custom_call.1} parent=1 // pred_check
      _
    $region3: #{tpu_custom_call.1} parent=1 // pred_check_branch
      %9 = sbr.rel (0) target = $region5
    $region4: #{tpu_custom_call.1} parent=1 // pred_region
      %s11 = ssub.s32 128, 128
      %12 = vsyncadd [#allocation3], %s11
      %s14 = sshll.u32 [#allocation2], 4
      %s15 = int_to_ptr.vmem [resolvable:$true] %s14
      %17 = dma.hbm_to_vmem [thread:$0]  %s0, 128, %s15, [#allocation3]
    $region5: #{tpu_custom_call.1} parent=1 // pred_fallthru
      _
    // Predicated region
    $region6: #{tpu_custom_call.1} parent=1 // pred_check
      _
    $region7: #{tpu_custom_call.1} parent=1 // pred_check_branch
      %19 = sbr.rel (0) target = $region9
    $region8: #{tpu_custom_call.1} parent=1 // pred_region
      %20 = dma.done [#allocation3], 128
    $region9: #{tpu_custom_call.1} parent=1 // pred_fallthru
      _
    %v21 = vld [vmem:[#allocation2] sm:$0xff]
    %22 = vrot.lane.b32.xlu0 %v21, 1
    %v23 = vpop.permute.xlu0 %22
    %24 = vst [vmem:[#allocation5] sm:$0xff] %v23
    // Predicated region
    $region10: #{tpu_custom_call.1} parent=1 // pred_check
      _
    $region11: #{tpu_custom_call.1} parent=1 // pred_check_branch
      %26 = sbr.rel (0) target = $region13
    $region12: #{tpu_custom_call.1} parent=1 // pred_region
      %s28 = ssub.s32 128, 128
      %29 = vsyncadd [#allocation4], %s28
      %s31 = sshll.u32 [#allocation5], 4
      %s32 = int_to_ptr.vmem [resolvable:$true] %s31
      %34 = dma.vmem_to_hbm [thread:$0]  %s32, 128, %s1, [#allocation4]
    $region13: #{tpu_custom_call.1} parent=1 // pred_fallthru
      _
    // Predicated region
    $region14: #{tpu_custom_call.1} parent=1 // pred_check
      _
    $region15: #{tpu_custom_call.1} parent=1 // pred_check_branch
      %36 = sbr.rel (0) target = $region17
    $region16: #{tpu_custom_call.1} parent=1 // pred_region
      %37 = dma.done [#allocation4], 128
    $region17: #{tpu_custom_call.1} parent=1 // pred_fallthru
      _
    %38 = vsyncpa [#allocation3], 1
    %39 = vsyncpa [#allocation4], 1

// kernel: tpu_custom_call.1
$region0: #{tpu_custom_call.1}
  #allocation0 [shape = 'u32[]', space=smem, size = 0x4, offset = 0x4, fixed_abs, tag = 'smem constant byte address 0x4 - core index']
  #allocation1 [shape = 'u32[144,128]{1,0:T(1,128)}', space=vmem, size = 0x12000, scoped, tag = 'internal scratch']
  #allocation2 [shape = 'f32[1,256]{1,0:T(1,128)}', space=vmem, size = 0x400, scoped, tag = 'scratch operand']
  #allocation3 [shape = 'f32[1,256]{1,0:T(1,128)}', space=vmem, size = 0x400, scoped, tag = 'scratch operand']
  %s0 = inlined_call_operand.hbm [shape: f32[48,256], index: 0, kind: input, shape index: {}]
  %s1 = inlined_call_operand.hbm [shape: f32[2,1,256], index: 1, kind: output, shape index: {}]
  %s2 = sld [smem:[#allocation0]]
  $region49: #{tpu_custom_call.1} parent=0
    _
  %s4 = ssub.s32 1, %s2
  %s5 = scalar_select 0, %s4, %s2
  $region1: #{tpu_custom_call.1} parent=0
    #allocation4 [shape = 'u8[49152]{0}', space=vmem, size = 0xc000, scoped, tag = 'input window, operand 0']
    #allocation5 [shape = 's32[2]{0}', space=sflag, size = 0x8, scoped, tag = 'scoped memory for tpu_custom_call.1']
    #allocation6 [shape = 's32[2]{0}', space=sflag, size = 0x8, scoped, tag = 'scoped memory for tpu_custom_call.1']
    #allocation7 [shape = 'u8[2048]{0}', space=vmem, size = 0x800, scoped, tag = 'output window, operand 0']
    %6 = vsyncpa [#allocation5], 0
    %s7 = scalar_lea.sflag [#allocation5], 1
    %8 = vsyncpa %s7, 0
    %9 = vsyncpa [#allocation6], 0
    %s10 = scalar_lea.sflag [#allocation6], 1
    %11 = vsyncpa %s10, 0
    loop: start=0, step=1, limit=4
    $region2: #{tpu_custom_call.1} parent=1 // loop_pre_header
      _
    $region3: #{tpu_custom_call.1} parent=1 // loop_header
      %s13 = sphi 0, %s17
      %p14 = scmp.ge.s32.totalorder %s13, 4
      %s20 = sphi 0, %s32
      %s21 = sphi 0, %s28
      %s22 = sphi 0, %s20
      %s23 = sphi 0, %s21
      %s24 = sphi 0, %s22
      %s25 = sphi 0, %s23
      %s37 = sphi 0, %s39
      %s40 = sphi 0, %s37
      %s41 = sphi 0, %s40
      %s57 = sphi 0, %s41
      %s63 = sphi 0, %s65
      %s66 = sphi 0, %s63
      %s67 = sphi 0, %s66
      %s83 = sphi 0, %s67
    $region4: #{tpu_custom_call.1} parent=1 // loop_header_branch
      %16 = sbr.rel (%p14) target = $region8
    $region5: #{tpu_custom_call.1} parent=1 // loop_body
      %s18 = ssub.s32 %s13, 1
      %s19 = ssub.s32 %s13, 2
      %s26 = sadd.s32 1, %s21
      %p27 = scmp.ge.s32.totalorder %s26, 1
      %s28 = scalar_select %p27, 0, %s26
      %s29 = sadd.s32 1, %s20
      %s30 = scalar_select %p27, %s29, %s20
      %p31 = scmp.ge.s32.totalorder %s30, 2
      %s32 = scalar_select %p31, 0, %s30
      %s33 = sadd.s32 %s20, %s21
      %s34 = sadd.s32 %s32, %s28
      %s35 = ssub.s32 %s33, %s34
      %p36 = scmp.eq.s32.totalorder %s35, 0
      %s38 = sadd.s32 %s37, 1
      %s39 = scalar_select %p36, %s37, %s38
      %p42 = pneg %p36
      %p43 = scmp.eq.s32.totalorder %s13, 1
      %p44 = por %p42, %p43
      %p45 = scmp.ne.s32.totalorder %s37, %s40
      %p46 = scmp.eq.s32.totalorder %s13, 0
      %p47 = por %p45, %p46
      %p48 = scmp.ne.s32.totalorder %s37, %s40
      %p49 = scmp.eq.s32.totalorder %s18, 1
      %p50 = por %p48, %p49
      %p51 = scmp.ne.s32.totalorder %s40, %s41
      %p52 = scmp.eq.s32.totalorder %s18, 0
      %p53 = por %p51, %p52
      %p54 = scmp.ne.s32.totalorder %s40, %s41
      %p55 = scmp.eq.s32.totalorder %s19, 1
      %p56 = por %p54, %p55
      %p58 = scmp.ne.s32.totalorder %s41, %s57
      %p59 = scmp.eq.s32.totalorder %s19, 0
      %p60 = por %p58, %p59
      %s61 = ssub.s32 %s20, %s32
      %p62 = scmp.eq.s32.totalorder %s61, 0
      %s64 = sadd.s32 %s63, 1
      %s65 = scalar_select %p62, %s63, %s64
      %p68 = pneg %p62
      %p69 = scmp.eq.s32.totalorder %s13, 1
      %p70 = por %p68, %p69
      %p71 = scmp.ne.s32.totalorder %s63, %s66
      %p72 = scmp.eq.s32.totalorder %s13, 0
      %p73 = por %p71, %p72
      %p74 = scmp.ne.s32.totalorder %s63, %s66
      %p75 = scmp.eq.s32.totalorder %s18, 1
      %p76 = por %p74, %p75
      %p77 = scmp.ne.s32.totalorder %s66, %s67
      %p78 = scmp.eq.s32.totalorder %s18, 0
      %p79 = por %p77, %p78
      %p80 = scmp.ne.s32.totalorder %s66, %s67
      %p81 = scmp.eq.s32.totalorder %s19, 1
      %p82 = por %p80, %p81
      %p84 = scmp.ne.s32.totalorder %s67, %s83
      %p85 = scmp.eq.s32.totalorder %s19, 0
      %p86 = por %p84, %p85
      %p87 = scmp.le.s32.totalorder 1, %s13
      %p88 = scmp.lt.s32.totalorder %s13, 3
      %p89 = pnand %p87, %p88
      %p90 = pneg %p89
      // Predicated region
      $region9: #{tpu_custom_call.1} parent=5 // pred_check
        _
      $region10: #{tpu_custom_call.1} parent=5 // pred_check_branch
        %92 = sbr.rel (%p89) target = $region12
      $region11: #{tpu_custom_call.1} parent=5 // pred_region
        %s93 = ssub.s32 %s13, 1
      $region12: #{tpu_custom_call.1} parent=5 // pred_fallthru
        _
      %p94 = scmp.lt.s32.totalorder %s13, 2
      // Predicated region
      $region13: #{tpu_custom_call.1} parent=5 // pred_check
        %p95 = pneg %p94
      $region14: #{tpu_custom_call.1} parent=5 // pred_check_branch
        %97 = sbr.rel (%p95) target = $region16
      $region15: #{tpu_custom_call.1} parent=5 // pred_region
        // Predicated region
        $region17: #{tpu_custom_call.1} parent=15 // pred_check
          %p98 = pneg %p47
        $region18: #{tpu_custom_call.1} parent=15 // pred_check_branch
          %100 = sbr.rel (%p98) target = $region20
        $region19: #{tpu_custom_call.1} parent=15 // pred_region
          %s101 = sand.u32 %s37, 1
          %s102 = scalar_lea.sflag [#allocation5], %s101
          %s103 = sand.u32 %s37, 1
          %s104 = smul.addr %s103, 48
          %s105 = scalar_lea.vmem [#allocation4], %s104
          %s106 = sadd.s32 %s20, %s21
          %s107 = smul.u32 3, %s106
          %s109 = ssub.s32 768, 768
          %110 = vsyncadd %s102, %s109
          %s111 = smul.addr %s107, 2
          %s112 = smul.addr %s111, 128
          %s113 = scalar_lea.hbm %s0, %s112
          %s114 = sshll.u32 %s105, 4
          %s115 = int_to_ptr.vmem [resolvable:$true] %s114
          %120 = dma.hbm_to_vmem [thread:$0]  %s113, 768, %s115, %s102, 256, 256, 16
        $region20: #{tpu_custom_call.1} parent=15 // pred_fallthru
          _
      $region16: #{tpu_custom_call.1} parent=5 // pred_fallthru
        _
      %p121 = scmp.le.s32.totalorder 1, %s13
      %p122 = scmp.lt.s32.totalorder %s13, 3
      %p123 = pnand %p121, %p122
      %p124 = pneg %p123
      // Predicated region
      $region21: #{tpu_custom_call.1} parent=5 // pred_check
        _
      $region22: #{tpu_custom_call.1} parent=5 // pred_check_branch
        %126 = sbr.rel (%p123) target = $region24
      $region23: #{tpu_custom_call.1} parent=5 // pred_region
        %s127 = ssub.s32 %s13, 1
        %s128 = sand.u32 %s40, 1
        %s129 = scalar_lea.sflag [#allocation5], %s128
        %s130 = sand.u32 %s40, 1
        %s131 = smul.addr %s130, 48
        %s132 = scalar_lea.vmem [#allocation4], %s131
        // Predicated region
        $region25: #{tpu_custom_call.1} parent=23 // pred_check
          %p133 = pneg %p53
        $region26: #{tpu_custom_call.1} parent=23 // pred_check_branch
          %135 = sbr.rel (%p133) target = $region28
        $region27: #{tpu_custom_call.1} parent=23 // pred_region
          %136 = dma.done %s129, 768
        $region28: #{tpu_custom_call.1} parent=23 // pred_fallthru
          _
        %s137 = sand.u32 %s40, 1
        %s138 = scalar_lea.sflag [#allocation5], %s137
        %s139 = sand.u32 %s40, 1
        %s140 = smul.addr %s139, 48
        %s141 = scalar_lea.vmem [#allocation4], %s140
        %p142 = pneg %p53
        %p143 = pneg %p50
        %p144 = pneg %p79
        %p145 = pneg %p76
        %s146 = sand.u32 %s66, 1
        %s147 = scalar_lea.sflag [#allocation6], %s146
        %s148 = sand.u32 %s66, 1
        %s149 = smul.addr %s148, 2
        %s150 = scalar_lea.vmem [#allocation7], %s149
        %s151 = sadd.s32 %s22, %s23
        %s152 = smul.u32 3, %s151
        %p153 = scmp.eq.s32.totalorder %s23, 0
        // Predicated region
        $region29: #{tpu_custom_call.1} parent=23 // pred_check
          %p154 = pneg %p153
        $region30: #{tpu_custom_call.1} parent=23 // pred_check_branch
          %156 = sbr.rel (%p154) target = $region32
        $region31: #{tpu_custom_call.1} parent=23 // pred_region
          %v157 = vlaneseq
          %vm158 = vcmp.ge.s32.totalorder %v157, 0
          %vm159 = vcmp.lt.s32.totalorder %v157, 256
          %vm160 = vmand %vm158, %vm159
          %161 = vst.msk [vmem:[#allocation2] sm:$0x3] %vm160, 0.0
        $region32: #{tpu_custom_call.1} parent=23 // pred_fallthru
          _
        %s162 = sadd.s32 %s22, %s23
        %s163 = smul.u32 %s162, 24
        %v164 = vld [vmem:[%s132] sm:$0xff]
        %v165 = vld [vmem:[%s132 + $0x8] sm:$0xff]
        %v166 = vld [vmem:[%s132 + $0x10] sm:$0xff]
        %v167 = vld [vmem:[%s132 + $0x18] sm:$0xff]
        %v168 = vld [vmem:[%s132 + $0x20] sm:$0xff]
        %v169 = vld [vmem:[%s132 + $0x28] sm:$0xff]
        %v170 = vlaneseq
        %v171 = vand.u32 %v170, 127
        %v172 = vadd.s32 %v171, 128
        %v173 = vlaneseq
        %v174 = vshrl.u32 %v173, 7
        %v175 = vadd.s32 %v174, 8
        %v176 = vadd.s32 %v174, 16
        %v177 = vstv %s163
        %v178 = vadd.s32 %v177, %v174
        %v179 = vadd.s32 %v177, %v175
        %v180 = vadd.s32 %v177, %v176
        %vm181 = vcmp.lt.s32.totalorder %v178, 48
        %vm182 = vcmp.lt.s32.totalorder %v179, 48
        %vm183 = vcmp.lt.s32.totalorder %v180, 48
        %190 = vrot.lane.b32.xlu0 %v164, 112
        %v191 = vpop.permute.xlu0 %190
        %192 = vrot.lane.b32.xlu0 %v165, 112
        %v193 = vpop.permute.xlu0 %192
        %194 = vrot.lane.b32.xlu0 %v166, 112
        %v195 = vpop.permute.xlu0 %194
        %196 = vrot.lane.b32.xlu0 %v167, 112
        %v197 = vpop.permute.xlu0 %196
        %198 = vrot.lane.b32.xlu0 %v168, 112
        %v199 = vpop.permute.xlu0 %198
        %200 = vrot.lane.b32.xlu0 %v169, 112
        %v201 = vpop.permute.xlu0 %200
        %vm202 = vcmask 916480
        %v203 = vsel %vm202, %v191, %v193
        %v204 = vsel %vm202, %v195, %v197
        %v205 = vsel %vm202, %v199, %v201
        %v215 = vsel %vm202, %v193, %v191
        %v216 = vsel %vm202, %v197, %v195
        %v217 = vsel %vm202, %v201, %v199
        %v218 = vsub.f32 %v203, %v164
        %v219 = vsub.f32 %v215, %v165
        %v220 = vsub.f32 %v204, %v166
        %v221 = vsub.f32 %v216, %v167
        %v222 = vsub.f32 %v205, %v168
        %v223 = vsub.f32 %v217, %v169
        %v224 = vand.u32 2147483647, %v218
        %v225 = vand.u32 2147483647, %v219
        %v226 = vand.u32 2147483647, %v220
        %v227 = vand.u32 2147483647, %v221
        %v228 = vand.u32 2147483647, %v222
        %v229 = vand.u32 2147483647, %v223
        %230 = vrot.lane.b32.xlu0 %v164, 127
        %v231 = vpop.permute.xlu0 %230
        %232 = vrot.lane.b32.xlu0 %v165, 127
        %v233 = vpop.permute.xlu0 %232
        %234 = vrot.lane.b32.xlu0 %v166, 127
        %v235 = vpop.permute.xlu0 %234
        %236 = vrot.lane.b32.xlu0 %v167, 127
        %v237 = vpop.permute.xlu0 %236
        %238 = vrot.lane.b32.xlu0 %v168, 127
        %v239 = vpop.permute.xlu0 %238
        %240 = vrot.lane.b32.xlu0 %v169, 127
        %v241 = vpop.permute.xlu0 %240
        %vm242 = vcmask 1039360
        %v243 = vsel %vm242, %v231, %v233
        %v244 = vsel %vm242, %v235, %v237
        %v245 = vsel %vm242, %v239, %v241
        %v255 = vsel %vm242, %v233, %v231
        %v256 = vsel %vm242, %v237, %v235
        %v257 = vsel %vm242, %v241, %v239
        %v258 = vsub.f32 %v243, %v164
        %v259 = vsub.f32 %v255, %v165
        %v260 = vsub.f32 %v244, %v166
        %v261 = vsub.f32 %v256, %v167
        %v262 = vsub.f32 %v245, %v168
        %v263 = vsub.f32 %v257, %v169
        %v264 = vand.u32 2147483647, %v258
        %v265 = vand.u32 2147483647, %v259
        %v266 = vand.u32 2147483647, %v260
        %v267 = vand.u32 2147483647, %v261
        %v268 = vand.u32 2147483647, %v262
        %v269 = vand.u32 2147483647, %v263
        %vm270 = vcmp.lt.s32.totalorder %v171, 240
        %vm271 = vcmp.lt.s32.totalorder %v172, 240
        %v272 = vsel %vm181, 1, 0
        %v273 = vsel %vm182, 1, 0
        %v274 = vsel %vm183, 1, 0
        %vm275 = vcmp.eq.s32.totalorder %v272, 1
        %vm276 = vcmp.eq.s32.totalorder %v273, 1
        %vm277 = vcmp.eq.s32.totalorder %v274, 1
        %v278 = vsel %vm270, 1, 0
        %v279 = vsel %vm271, 1, 0
        %vm280 = vcmp.eq.s32.totalorder %v278, 1
        %vm281 = vcmp.eq.s32.totalorder %v279, 1
        %vm282 = vmand %vm275, %vm280
        %vm283 = vmand %vm275, %vm281
        %vm284 = vmand %vm276, %vm280
        %vm285 = vmand %vm276, %vm281
        %vm286 = vmand %vm277, %vm280
        %vm287 = vmand %vm277, %vm281
        %vm288 = vcmp.lt.s32.totalorder %v171, 256
        %vm289 = vcmp.lt.s32.totalorder %v172, 256
        %v290 = vsel %vm288, 1, 0
        %v291 = vsel %vm289, 1, 0
        %vm292 = vcmp.eq.s32.totalorder %v290, 1
        %vm293 = vcmp.eq.s32.totalorder %v291, 1
        %vm294 = vmand %vm275, %vm292
        %vm295 = vmand %vm275, %vm293
        %vm296 = vmand %vm276, %vm292
        %vm297 = vmand %vm276, %vm293
        %vm298 = vmand %vm277, %vm292
        %vm299 = vmand %vm277, %vm293
        %vm300 = vcmp.lt.s32.totalorder %v171, 0
        %v301 = vsub.s32 0, %v171
        %v302 = vsel %vm300, %v301, %v171
        %v303 = vshrl.u32 %v302, 4
        %v304 = vand.u32 %v302, 15
        %v305 = vsub.s32 0, %v304
        %v306 = vsel %vm300, %v305, %v304
        %vm307 = vcmp.lt.s32.totalorder %v172, 0
        %v308 = vsub.s32 0, %v172
        %v309 = vsel %vm307, %v308, %v172
        %v310 = vshrl.u32 %v309, 4
        %v311 = vand.u32 %v309, 15
        %v312 = vsub.s32 0, %v311
        %v313 = vsel %vm307, %v312, %v311
        %vm314 = vcmp.ne.s32.totalorder %v306, 0
        %vm315 = vcmp.ne.s32.totalorder %v313, 0
        %vm316 = vcmp.lt.s32.totalorder %v306, 0
        %vm317 = vcmp.lt.s32.totalorder %v313, 0
        %vm318 = vmand %vm316, %vm314
        %vm319 = vmand %vm317, %vm315
        %v320 = vadd.s32 %v306, 16
        %v321 = vadd.s32 %v313, 16
        %v322 = vsel %vm318, %v320, %v306
        %v323 = vsel %vm319, %v321, %v313
        %vm324 = vcmp.lt.s32.totalorder %v322, 15
        %vm325 = vcmp.lt.s32.totalorder %v323, 15
        %v326 = vsel %vm324, 1, 0
        %v327 = vsel %vm325, 1, 0
        %vm328 = vcmp.eq.s32.totalorder %v326, 1
        %vm329 = vcmp.eq.s32.totalorder %v327, 1
        %vm330 = vmand %vm294, %vm328
        %vm331 = vmand %vm295, %vm329
        %vm332 = vmand %vm296, %vm328
        %vm333 = vmand %vm297, %vm329
        %vm334 = vmand %vm298, %vm328
        %vm335 = vmand %vm299, %vm329
        %v336 = vsel %vm282, %v224, 0.0
        %v337 = vsel %vm283, %v225, 0.0
        %v338 = vsel %vm284, %v226, 0.0
        %v339 = vsel %vm285, %v227, 0.0
        %v340 = vsel %vm286, %v228, 0.0
        %v341 = vsel %vm287, %v229, 0.0
        %v342 = vmul.f32 %v336, 2.8935185e-05
        %v343 = vmul.f32 %v337, 2.8935185e-05
        %v344 = vmul.f32 %v338, 2.8935185e-05
        %v345 = vmul.f32 %v339, 2.8935185e-05
        %v346 = vmul.f32 %v340, 2.8935185e-05
        %v347 = vmul.f32 %v341, 2.8935185e-05
        %v348 = vsel %vm330, %v264, 0.0
        %v349 = vsel %vm331, %v265, 0.0
        %v350 = vsel %vm332, %v266, 0.0
        %v351 = vsel %vm333, %v267, 0.0
        %v352 = vsel %vm334, %v268, 0.0
        %v353 = vsel %vm335, %v269, 0.0
        %v354 = vmul.f32 %v348, 2.8935185e-05
        %v355 = vmul.f32 %v349, 2.8935185e-05
        %v356 = vmul.f32 %v350, 2.8935185e-05
        %v357 = vmul.f32 %v351, 2.8935185e-05
        %v358 = vmul.f32 %v352, 2.8935185e-05
        %v359 = vmul.f32 %v353, 2.8935185e-05
        %v360 = vadd.f32 %v342, %v354
        %v361 = vadd.f32 %v343, %v355
        %v362 = vadd.f32 %v344, %v356
        %v363 = vadd.f32 %v345, %v357
        %v364 = vadd.f32 %v346, %v358
        %v365 = vadd.f32 %v347, %v359
        %v366 = vld [vmem:[#allocation3] sm:$0x3]
        %v368 = vlaneseq
        %v369 = vshrl.u32 %v368, 7
        %v370 = vsub.s32 0, %v369
        %v371 = vrot.slane %v366, %v370
        %v372 = vlaneseq
        %v373 = vshrl.u32 %v372, 7
        %v374 = vsub.s32 1, %v373
        %v375 = vrot.slane %v366, %v374
        %v378 = vsub.f32 %v164, %v371
        %v379 = vsub.f32 %v165, %v375
        %v380 = vand.u32 2147483647, %v378
        %v381 = vand.u32 2147483647, %v379
        %vm382 = vcmp.lt.s32.totalorder %v178, 0
        %v383 = vsub.s32 0, %v178
        %v384 = vsel %vm382, %v383, %v178
        %v385 = vshrl.u32 %v384, 3
        %v386 = vand.u32 %v384, 7
        %v387 = vsub.s32 0, %v386
        %v388 = vsel %vm382, %v387, %v386
        %vm389 = vcmp.ne.s32.totalorder %v388, 0
        %vm390 = vcmp.lt.s32.totalorder %v388, 0
        %vm391 = vmand %vm390, %vm389
        %v392 = vadd.s32 %v388, 8
        %v393 = vsel %vm391, %v392, %v388
        %vm394 = vcmp.ne.s32.totalorder %v393, 0
        %vm395 = vmand %vm181, %vm394
        %v396 = vsel %vm395, 1, 0
        %vm397 = vcmp.eq.s32.totalorder %v396, 1
        %v398 = vsel %vm397, %v380, 0.0
        %v399 = vsel %vm397, %v381, 0.0
        %vm400 = vcmask 1040384
        %v401 = vrot.slane %v164, 7
        %v402 = vrot.slane %v165, 7
        %v403 = vrot.slane %v166, 7
        %v404 = vsel %vm400, %v401, %v403
        %v405 = vrot.slane %v167, 7
        %v406 = vsel %vm400, %v402, %v405
        %v407 = vrot.slane %v168, 7
        %v408 = vsel %vm400, %v403, %v407
        %v409 = vrot.slane %v169, 7
        %v410 = vsel %vm400, %v405, %v409
        %v417 = vsub.f32 %v164, %v401
        %v418 = vsub.f32 %v165, %v402
        %v419 = vsub.f32 %v166, %v404
        %v420 = vsub.f32 %v167, %v406
        %v421 = vsub.f32 %v168, %v408
        %v422 = vsub.f32 %v169, %v410
        %v423 = vand.u32 2147483647, %v417
        %v424 = vand.u32 2147483647, %v418
        %v425 = vand.u32 2147483647, %v419
        %v426 = vand.u32 2147483647, %v420
        %v427 = vand.u32 2147483647, %v421
        %v428 = vand.u32 2147483647, %v422
        %vm429 = vcmp.lt.s32.totalorder %v179, 0
        %v430 = vsub.s32 0, %v179
        %v431 = vsel %vm429, %v430, %v179
        %v432 = vshrl.u32 %v431, 3
        %v433 = vand.u32 %v431, 7
        %v434 = vsub.s32 0, %v433
        %v435 = vsel %vm429, %v434, %v433
        %vm436 = vcmp.lt.s32.totalorder %v180, 0
        %v437 = vsub.s32 0, %v180
        %v438 = vsel %vm436, %v437, %v180
        %v439 = vshrl.u32 %v438, 3
        %v440 = vand.u32 %v438, 7
        %v441 = vsub.s32 0, %v440
        %v442 = vsel %vm436, %v441, %v440
        %vm443 = vcmp.ne.s32.totalorder %v435, 0
        %vm444 = vcmp.ne.s32.totalorder %v442, 0
        %vm445 = vcmp.lt.s32.totalorder %v435, 0
        %vm446 = vcmp.lt.s32.totalorder %v442, 0
        %vm447 = vmand %vm445, %vm443
        %vm448 = vmand %vm446, %vm444
        %v449 = vadd.s32 %v435, 8
        %v450 = vadd.s32 %v442, 8
        %v451 = vsel %vm447, %v449, %v435
        %v452 = vsel %vm448, %v450, %v442
        %vm453 = vcmp.ne.s32.totalorder %v451, 0
        %vm454 = vcmp.ne.s32.totalorder %v452, 0
        %vm455 = vmand %vm182, %vm453
        %vm456 = vmand %vm183, %vm454
        %v457 = vsel %vm455, 1, 0
        %v458 = vsel %vm456, 1, 0
        %vm459 = vcmp.eq.s32.totalorder %v457, 1
        %vm460 = vcmp.eq.s32.totalorder %v458, 1
        %v461 = vsel %vm397, %v423, 0.0
        %v462 = vsel %vm397, %v424, 0.0
        %v463 = vsel %vm459, %v425, 0.0
        %v464 = vsel %vm459, %v426, 0.0
        %v465 = vsel %vm460, %v427, 0.0
        %v466 = vsel %vm460, %v428, 0.0
        %vm473 = vcmask 1046528
        %v474 = vrot.slane %v461, 1
        %v475 = vrot.slane %v463, 1
        %v476 = vsel %vm473, %v474, %v475
        %v477 = vrot.slane %v462, 1
        %v478 = vrot.slane %v464, 1
        %v479 = vsel %vm473, %v477, %v478
        %v480 = vrot.slane %v465, 1
        %v481 = vsel %vm473, %v475, %v480
        %v482 = vrot.slane %v466, 1
        %v483 = vsel %vm473, %v478, %v482
        %v490 = vadd.f32 %v476, %v481
        %v491 = vsel %vm473, %v480, 0.0
        %v492 = vadd.f32 %v490, %v491
        %v493 = vrot.slane %v492, 4
        %v494 = vadd.f32 %v492, %v493
        %v495 = vrot.slane %v494, 2
        %v496 = vadd.f32 %v494, %v495
        %v497 = vrot.slane %v496, 1
        %v498 = vadd.f32 %v496, %v497
        %v499 = vadd.f32 %v479, %v483
        %v500 = vsel %vm473, %v482, 0.0
        %v501 = vadd.f32 %v499, %v500
        %v502 = vrot.slane %v501, 4
        %v503 = vadd.f32 %v501, %v502
        %v504 = vrot.slane %v503, 2
        %v505 = vadd.f32 %v503, %v504
        %v506 = vrot.slane %v505, 1
        %v507 = vadd.f32 %v505, %v506
        %v508 = vadd.f32 %v398, %v498
        %v509 = vadd.f32 %v399, %v507
        %v510 = vld [vmem:[#allocation2] sm:$0x3]
        %v511 = vadd.f32 %v360, %v362
        %v512 = vadd.f32 %v511, %v364
        %v513 = vrot.slane %v512, 4
        %v514 = vadd.f32 %v512, %v513
        %v515 = vrot.slane %v514, 2
        %v516 = vadd.f32 %v514, %v515
        %v517 = vrot.slane %v516, 1
        %v518 = vadd.f32 %v516, %v517
        %v519 = vadd.f32 %v361, %v363
        %v520 = vadd.f32 %v519, %v365
        %v521 = vrot.slane %v520, 4
        %v522 = vadd.f32 %v520, %v521
        %v523 = vrot.slane %v522, 2
        %v524 = vadd.f32 %v522, %v523
        %v525 = vrot.slane %v524, 1
        %v526 = vadd.f32 %v524, %v525
        %v527 = vmul.f32 %v508, 3.1001986e-05
        %v528 = vmul.f32 %v509, 3.1001986e-05
        %v529 = vadd.f32 %v518, %v527
        %v530 = vadd.f32 %v526, %v528
        %v533 = vcombine.low %v529, %v530
        %v535 = vunpack.c.l.s4 1966171168
        %v536 = vunpack.c.0.s8 %v535
        %v537 = vlaneseq
        %v538 = vshrl.u32 %v537, 7
        %v539 = vsub.s32 %v536, %v538
        %v540 = vrot.slane %v533, %v539
        %v542 = vunpack.c.l.s4 1966171168
        %v543 = vunpack.c.0.s8 %v542
        %v544 = vlaneseq
        %v545 = vshrl.u32 %v544, 7
        %v546 = vsub.s32 %v543, %v545
        %v547 = vrot.slane %v540, %v546
        %v549 = vadd.f32 %v510, %v547
        %v550 = vlaneseq
        %vm551 = vcmp.ge.s32.totalorder %v550, 0
        %vm552 = vcmp.lt.s32.totalorder %v550, 256
        %vm553 = vmand %vm551, %vm552
        %554 = vst.msk [vmem:[#allocation2] sm:$0x3] %vm553, %v549
        %v555 = vcombine.high %v168, %v169
        %v557 = vunpack.c.l.s4 1966171168
        %v558 = vunpack.c.0.s8 %v557
        %v559 = vlaneseq
        %v560 = vshrl.u32 %v559, 7
        %v561 = vsub.s32 %v558, %v560
        %v562 = vrot.slane %v555, %v561
        %v563 = vcombine.high %v562, %v562
        %v565 = vunpack.c.l.s4 1966171168
        %v566 = vunpack.c.0.s8 %v565
        %v567 = vlaneseq
        %v568 = vshrl.u32 %v567, 7
        %v569 = vsub.s32 %v566, %v568
        %v570 = vrot.slane %v563, %v569
        %v571 = vcombine.high %v570, %v570
        %573 = vst.msk [vmem:[#allocation3] sm:$0x3] %vm553, %v571
        // Predicated region
        $region33: #{tpu_custom_call.1} parent=23 // pred_check
          %p574 = pneg %p153
        $region34: #{tpu_custom_call.1} parent=23 // pred_check_branch
          %576 = sbr.rel (%p574) target = $region36
        $region35: #{tpu_custom_call.1} parent=23 // pred_region
          %v577 = vld [vmem:[#allocation2] sm:$0x3]
          %578 = vst.msk [vmem:[%s150] sm:$0x3] %vm553, %v577
        $region36: #{tpu_custom_call.1} parent=23 // pred_fallthru
          _
        %s579 = sand.u32 %s66, 1
        %s580 = scalar_lea.sflag [#allocation6], %s579
        %s581 = sand.u32 %s66, 1
        %s582 = smul.addr %s581, 2
        %s583 = scalar_lea.vmem [#allocation7], %s582
        // Predicated region
        $region37: #{tpu_custom_call.1} parent=23 // pred_check
          %p584 = pneg %p76
        $region38: #{tpu_custom_call.1} parent=23 // pred_check_branch
          %586 = sbr.rel (%p584) target = $region40
        $region39: #{tpu_custom_call.1} parent=23 // pred_region
          %s588 = ssub.s32 32, 32
          %589 = vsyncadd %s580, %s588
          %s590 = smul.addr %s22, 2
          %s591 = smul.addr %s590, 16
          %s592 = scalar_lea.hbm %s1, %s591
          %s594 = sshll.u32 %s583, 4
          %s595 = int_to_ptr.vmem [resolvable:$true] %s594
          %597 = dma.vmem_to_hbm [thread:$0]  %s595, 32, %s592, %s580
        $region40: #{tpu_custom_call.1} parent=23 // pred_fallthru
          _
      $region24: #{tpu_custom_call.1} parent=5 // pred_fallthru
        _
      %p598 = scmp.le.s32.totalorder 2, %s13
      // Predicated region
      $region41: #{tpu_custom_call.1} parent=5 // pred_check
        %p599 = pneg %p598
      $region42: #{tpu_custom_call.1} parent=5 // pred_check_branch
        %601 = sbr.rel (%p599) target = $region44
      $region43: #{tpu_custom_call.1} parent=5 // pred_region
        %s602 = ssub.s32 %s13, 2
        // Predicated region
        $region45: #{tpu_custom_call.1} parent=43 // pred_check
          %p603 = pneg %p82
        $region46: #{tpu_custom_call.1} parent=43 // pred_check_branch
          %605 = sbr.rel (%p603) target = $region48
        $region47: #{tpu_custom_call.1} parent=43 // pred_region
          %s606 = sand.u32 %s67, 1
          %s607 = scalar_lea.sflag [#allocation6], %s606
          %s608 = sand.u32 %s67, 1
          %s609 = smul.addr %s608, 2
          %s610 = scalar_lea.vmem [#allocation7], %s609
          %611 = dma.done %s607, 32
        $region48: #{tpu_custom_call.1} parent=43 // pred_fallthru
          _
      $region44: #{tpu_custom_call.1} parent=5 // pred_fallthru
        _
    $region6: #{tpu_custom_call.1} parent=1 // loop_footer
      %s17 = sadd.s32 1, %s13
    $region7: #{tpu_custom_call.1} parent=1 // loop_footer_branch
      %12 = sbr.rel target = $region3
    $region8: #{tpu_custom_call.1} parent=1 // loop_exit
      _
    %612 = vsyncpa [#allocation5], 1
    %s613 = scalar_lea.sflag [#allocation5], 1
    %614 = vsyncpa %s613, 1
    %615 = vsyncpa [#allocation6], 1
    %s616 = scalar_lea.sflag [#allocation6], 1
    %617 = vsyncpa %s616, 1

</llo_original>
